<compile_context>
chip_gen: v7x
topology: tpu7x:2x2x1
jax: 0.10.0
libtpu: 0.0.40
codegen_flags: <defaults>
</compile_context>

<pallas_src>
import jax
import jax.numpy as jnp
from jax.experimental import pallas as pl
from jax.experimental.pallas import tpu as pltpu


def _round_up(x, m):
    return ((x + m - 1) // m) * m


def _linear_kernel(x_ref, w_ref, b_ref, o_ref):
    # x_ref: (TB, D) f32 VMEM (double-buffered, streamed over batch tiles)
    # w_ref: (1, D)  f32 VMEM (resident across the whole grid)
    # b_ref: (1,)    f32 SMEM scalar
    # o_ref: (TB, 1) f32 VMEM
    # VPU multiply + cross-lane reduce: exact f32, hidden under the x DMA.
    o_ref[...] = (
        jnp.sum(x_ref[...] * w_ref[...], axis=-1, keepdims=True) + b_ref[0]
    )


def _dimension_semantics():
    # v7x has 2 TensorCores per chip; CORE_PARALLEL is what actually splits a
    # grid axis across them.  "parallel" is a safe no-op elsewhere.
    try:
        kind = jax.devices()[0].device_kind.lower()
    except Exception:  # pragma: no cover - defensive
        kind = ""
    if "7" in kind:
        return (pltpu.CORE_PARALLEL,)
    return (pltpu.PARALLEL,)


def linear_forward(image_latent, weight_t, bias, *, block_b=None,
                   x_vmem_budget_bytes=24 << 20):
    """image_latent: (B, 10, embed_dim) f32
       weight_t:     (10*embed_dim, 1) f32  (transposed nn.Linear weight)
       bias:         (1,) or (1,1) f32
       returns:      (B,) f32
    """
    B = image_latent.shape[0]
    D = weight_t.shape[0]

    # Glue: equivalent of image_latent.view(B, -1).
    x = image_latent.reshape(B, D).astype(jnp.float32)
    # Weight as a (1, D) row so the kernel can do a broadcast-multiply + reduce.
    w = weight_t.astype(jnp.float32).reshape(1, D)
    b = bias.astype(jnp.float32).reshape(1)

    # Batch tile: multiple of 8 (sublane).  Auto mode picks the largest tile
    # whose double-buffered x stream fits the VMEM budget (works for v7x's
    # 64 MiB VMEM as well as v5e/v6e's 128 MiB).
    if block_b is None:
        tb = x_vmem_budget_bytes // (2 * D * 4)
        tb = max(8, min(8192, (tb // 8) * 8))
    else:
        tb = max(8, (block_b // 8) * 8)
    TB = min(tb, _round_up(B, 8))

    # No wrapper-side padding: Pallas masks the ragged final block; out-of-range
    # rows of the last x tile only affect rows that never get written back.
    grid = (pl.cdiv(B, TB),)

    # Explicit VMEM budget: double-buffered x tile + double-buffered out tile +
    # resident weight + slack.
    needed = 2 * TB * D * 4 + 2 * TB * 4 + 2 * D * 4 + (2 << 20)
    vmem_limit = int(max(needed, 16 << 20))

    cost = pl.CostEstimate(
        flops=2 * B * D,
        transcendentals=0,
        bytes_accessed=4 * (B * D + D + B),
    )

    out = pl.pallas_call(
        _linear_kernel,
        out_shape=jax.ShapeDtypeStruct((B, 1), jnp.float32),
        grid_spec=pltpu.PrefetchScalarGridSpec(
            num_scalar_prefetch=0,
            grid=grid,
            in_specs=[
                # x: tiled over batch -> double-buffered streaming from HBM.
                pl.BlockSpec((TB, D), lambda i: (i, 0)),
                # weight: same block every step -> stays resident in VMEM.
                pl.BlockSpec((1, D), lambda i: (0, 0)),
                # bias: scalar in SMEM.
                pl.BlockSpec(memory_space=pltpu.MemorySpace.SMEM),
            ],
            out_specs=pl.BlockSpec((TB, 1), lambda i: (i, 0)),
        ),
        compiler_params=pltpu.CompilerParams(
            dimension_semantics=_dimension_semantics(),
            vmem_limit_bytes=vmem_limit,
        ),
        cost_estimate=cost,
    )(x, w, b)

    # Glue: equivalent of logits.squeeze(1).
    return out[:, 0]


if __name__ == "__main__":
    # Small, deterministic setup consistent with the module:
    #   embed_dim = 32  -> in_features = 320, out_features = 1
    embed_dim = 32
    in_features = embed_dim * 10

    key = jax.random.PRNGKey(0)
    k_x, k_w, k_b, k_x2 = jax.random.split(key, 4)

    # PyTorch-style nn.Linear init: U(-1/sqrt(fan_in), 1/sqrt(fan_in))
    bound = 1.0 / (in_features ** 0.5)
    weight = jax.random.uniform(k_w, (1, in_features), minval=-bound,
                                maxval=bound, dtype=jnp.float32)  # (out, in)
    bias = jax.random.uniform(k_b, (1,), minval=-bound, maxval=bound,
                              dtype=jnp.float32)
    weight_t = weight.T  # (in_features, 1)

    # Case 1: single-tile path (B=8, auto tile size).
    B1 = 8
    x1 = jax.random.normal(k_x, (B1, 10, embed_dim), dtype=jnp.float32)
    out1 = jax.block_until_ready(linear_forward(x1, weight_t, bias))
    ref1 = (x1.reshape(B1, -1) @ weight.T + bias)[:, 0]
    assert out1.shape == (B1,), out1.shape
    assert jnp.allclose(out1, ref1, atol=1e-5, rtol=1e-5)

    # Case 2: multi-tile path with a ragged final block (B=20, TB=16 -> grid=2).
    B2 = 20
    x2 = jax.random.normal(k_x2, (B2, 10, embed_dim), dtype=jnp.float32)
    out2 = jax.block_until_ready(linear_forward(x2, weight_t, bias, block_b=16))
    ref2 = (x2.reshape(B2, -1) @ weight.T + bias)[:, 0]
    assert out2.shape == (B2,), out2.shape
    assert jnp.allclose(out2, ref2, atol=1e-5, rtol=1e-5)

    print("KERNEL_OK")
</pallas_src>

<mosaic_0001>
module attributes {stable_mosaic.version = 11 : i64} {
  func.func @_linear_kernel(%arg0: i32, %arg1: memref<8x320xf32, #tpu.memory_space<vmem>>, %arg2: memref<1x320xf32, #tpu.memory_space<vmem>>, %arg3: memref<1xf32, #tpu.memory_space<smem>>, %arg4: memref<8x1xf32, #tpu.memory_space<vmem>>) attributes {dimension_semantics = [#tpu.dimension_semantics<parallel>], iteration_bounds = array<i64: 1>, scalar_prefetch = 0 : i64, scratch_operands = 0 : i64, tpu.core_type = #tpu.core_type<tc>, window_params = [{transform_indices = @transform_0, window_bounds = array<i64: 8, 320>}, {pipeline_mode = #tpu.pipeline_mode<synchronous>, transform_indices = @transform_1, window_bounds = array<i64: 1, 320>}, {transform_indices = @transform_2, window_bounds = array<i64: 1>}, {transform_indices = @transform_3, window_bounds = array<i64: 8, 1>}]} {
    %c0 = arith.constant 0 : index
    %c0_0 = arith.constant 0 : index
    %0 = vector.load %arg1[%c0, %c0_0] : memref<8x320xf32, #tpu.memory_space<vmem>>, vector<8x320xf32>
    %c0_1 = arith.constant 0 : index
    %c0_2 = arith.constant 0 : index
    %1 = vector.load %arg2[%c0_1, %c0_2] : memref<1x320xf32, #tpu.memory_space<vmem>>, vector<1x320xf32>
    %2 = vector.broadcast %1 : vector<1x320xf32> to vector<8x320xf32>
    %3 = arith.mulf %0, %2 : vector<8x320xf32>
    %cst = arith.constant dense<0.000000e+00> : vector<8xf32>
    %4 = vector.multi_reduction <add>, %3, %cst [1] : vector<8x320xf32> to vector<8xf32>
    %5 = vector.shape_cast %4 : vector<8xf32> to vector<8x1xf32>
    %c0_3 = arith.constant 0 : index
    %6 = memref.load %arg3[%c0_3] : memref<1xf32, #tpu.memory_space<smem>>
    %7 = vector.broadcast %6 : f32 to vector<8x1xf32>
    %8 = arith.addf %5, %7 : vector<8x1xf32>
    %c0_4 = arith.constant 0 : index
    %c0_5 = arith.constant 0 : index
    %9 = vector.load %arg4[%c0_4, %c0_5] : memref<8x1xf32, #tpu.memory_space<vmem>>, vector<8x1xf32>
    tpu.vector_store %arg4[%c0_4, %c0_5], %8 {strides = array<i32>} : memref<8x1xf32, #tpu.memory_space<vmem>>, vector<8x1xf32>,
    return
  }
  func.func @transform_0(%arg0: i32) -> (i32, i32) {
    %c0_i32 = arith.constant 0 : i32
    %c0_i32_0 = arith.constant 0 : i32
    return %arg0, %c0_i32 : i32, i32
  }
  func.func @transform_1(%arg0: i32) -> (i32, i32) {
    %c0_i32 = arith.constant 0 : i32
    %c0_i32_0 = arith.constant 0 : i32
    %c0_i32_1 = arith.constant 0 : i32
    return %c0_i32, %c0_i32_0 : i32, i32
  }
  func.func @transform_2(%arg0: i32) -> i32 {
    %c0_i32 = arith.constant 0 : i32
    %c0_i32_0 = arith.constant 0 : i32
    return %c0_i32 : i32
  }
  func.func @transform_3(%arg0: i32) -> (i32, i32) {
    %c0_i32 = arith.constant 0 : i32
    %c0_i32_0 = arith.constant 0 : i32
    return %arg0, %c0_i32 : i32, i32
  }
}

</mosaic_0001>

<llo_original>
// kernel: tpu_custom_call.1
$region0: #{tpu_custom_call.1}
  #allocation0 [shape = 'u32[]', space=smem, size = 0x4, offset = 0x4, fixed_abs, tag = 'smem constant byte address 0x4 - core index']
  #allocation1 [shape = 'u32[144,128]{1,0:T(1,128)}', space=vmem, size = 0x12000, scoped, tag = 'internal scratch']
  #allocation2 [shape = 'f32[1]{0:T(128)S(6)}', space=smem, size = 0x200, scoped, tag = 'scoped memory for tpu_custom_call.1']
  %s0 = inlined_call_operand.hbm [shape: f32[8,320], index: 0, kind: input, shape index: {}]
  %s1 = inlined_call_operand.vmem [shape: f32[1,320], index: 1, kind: input, shape index: {}]
  %s2 = inlined_call_operand.<no memory space> [shape: f32[1], index: 2, kind: input, shape index: {}]
  %s3 = inlined_call_operand.vmem [shape: f32[8,1], index: 3, kind: output, shape index: {}]
  %s4 = sld [smem:[#allocation0]]
  $region26: #{tpu_custom_call.1} parent=0
    _
  %s6 = ssub.s32 1, %s4
  %s7 = scalar_select 0, %s6, %s4
  %8 = sst [smem:[#allocation2]] %s2
  $region1: #{tpu_custom_call.1} parent=0
    #allocation3 [shape = 'u8[12288]{0}', space=vmem, size = 0x3000, scoped, tag = 'input window, operand 0, single buffered']
    #allocation4 [shape = 's32[1]{0}', space=sflag, size = 0x4, scoped, tag = 'scoped memory for tpu_custom_call.1']
    %9 = vsyncpa [#allocation4], 0
    // Predicated region
    $region2: #{tpu_custom_call.1} parent=1 // pred_check
      _
    $region3: #{tpu_custom_call.1} parent=1 // pred_check_branch
      %11 = sbr.rel (0) target = $region5
    $region4: #{tpu_custom_call.1} parent=1 // pred_region
      %s13 = ssub.s32 384, 384
      %14 = vsyncadd [#allocation4], %s13
      %s16 = sshll.u32 [#allocation3], 4
      %s17 = int_to_ptr.vmem [resolvable:$true] %s16
      %19 = dma.hbm_to_vmem [thread:$0]  %s0, 384, %s17, [#allocation4]
    $region5: #{tpu_custom_call.1} parent=1 // pred_fallthru
      _
    // Predicated region
    $region6: #{tpu_custom_call.1} parent=1 // pred_check
      _
    $region7: #{tpu_custom_call.1} parent=1 // pred_check_branch
      %21 = sbr.rel (0) target = $region9
    $region8: #{tpu_custom_call.1} parent=1 // pred_region
      _
    $region9: #{tpu_custom_call.1} parent=1 // pred_fallthru
      _
    // Predicated region
    $region10: #{tpu_custom_call.1} parent=1 // pred_check
      _
    $region11: #{tpu_custom_call.1} parent=1 // pred_check_branch
      %23 = sbr.rel (0) target = $region13
    $region12: #{tpu_custom_call.1} parent=1 // pred_region
      _
    $region13: #{tpu_custom_call.1} parent=1 // pred_fallthru
      _
    // Predicated region
    $region14: #{tpu_custom_call.1} parent=1 // pred_check
      _
    $region15: #{tpu_custom_call.1} parent=1 // pred_check_branch
      %25 = sbr.rel (0) target = $region17
    $region16: #{tpu_custom_call.1} parent=1 // pred_region
      %26 = dma.done [#allocation4], 384
    $region17: #{tpu_custom_call.1} parent=1 // pred_fallthru
      _
    %v27 = vld [vmem:[#allocation3] sm:$0xff]
    %v28 = vld [vmem:[#allocation3 + $0x8] sm:$0xff]
    %v29 = vld [vmem:[#allocation3 + $0x10] sm:$0xff]
    %v30 = vld [vmem:[%s1] sm:$0x7]
    %v32 = vlaneseq
    %v33 = vshrl.u32 %v32, 7
    %v34 = vsub.s32 0, %v33
    %v35 = vrot.slane %v30, %v34
    %v36 = vlaneseq
    %v37 = vshrl.u32 %v36, 7
    %v38 = vsub.s32 1, %v37
    %v39 = vrot.slane %v30, %v38
    %v40 = vlaneseq
    %v41 = vshrl.u32 %v40, 7
    %v42 = vsub.s32 2, %v41
    %v43 = vrot.slane %v30, %v42
    %v47 = vmul.f32 %v27, %v35
    %v48 = vmul.f32 %v28, %v39
    %v49 = vmul.f32 %v29, %v43
    %v50 = vadd.f32 %v47, %v48
    %vm51 = vcmask 523264
    %v52 = vsel %vm51, %v49, 0.0
    %v53 = vadd.f32 %v50, %v52
    %54 = vadd.xlane.f32.xlu0 %v53
    %v55 = vpop.xlane.xlu0 %54
    %s56 = sld [smem:[#allocation2]]
    %v57 = vstv %s56
    %v58 = vadd.f32 %v55, %v57
    %vm59 = vcmask 7168
    %60 = vst.msk [vmem:[%s3] sm:$0xff] %vm59, %v58
    // Predicated region
    $region18: #{tpu_custom_call.1} parent=1 // pred_check
      _
    $region19: #{tpu_custom_call.1} parent=1 // pred_check_branch
      %62 = sbr.rel (0) target = $region21
    $region20: #{tpu_custom_call.1} parent=1 // pred_region
      _
    $region21: #{tpu_custom_call.1} parent=1 // pred_fallthru
      _
    // Predicated region
    $region22: #{tpu_custom_call.1} parent=1 // pred_check
      _
    $region23: #{tpu_custom_call.1} parent=1 // pred_check_branch
      %64 = sbr.rel (0) target = $region25
    $region24: #{tpu_custom_call.1} parent=1 // pred_region
      _
    $region25: #{tpu_custom_call.1} parent=1 // pred_fallthru
      _
    %65 = vsyncpa [#allocation4], 1

</llo_original>
